<compile_context>
chip_gen: v6e
topology: v6e:2x2x1
jax: 0.10.0
libtpu: 0.0.40
codegen_flags: <defaults>
</compile_context>

<pallas_src>
import jax
import jax.numpy as jnp
from jax.experimental import pallas as pl
from jax.experimental.pallas import tpu as pltpu

LANES = 128   # vreg lane width: batch maps to lanes
HIDDEN = 8    # hidden width of the MLP


def mlp_kernel(w1_ref, b1_ref, w2_ref, b2_ref, x_ref, o_ref):
    # w1_ref/b1_ref/w2_ref: (8,) f32 in SMEM; b2_ref: (1,) f32 in SMEM
    # x_ref / o_ref: (tile_rows, 128) lane-dense batch tile in VMEM
    x = x_ref[...]
    acc = jnp.full_like(x, b2_ref[0])            # broadcast b2 once (hoisted)
    for k in range(HIDDEN):                      # static unroll: 8 VPU FMA + ReLU terms
        h = jnp.maximum(w1_ref[k] * x + b1_ref[k], 0.0)
        acc = acc + w2_ref[k] * h
    o_ref[...] = acc                             # single full-tile, unmasked store


def mlp_forward(x, w1, b1, w2, b2, *, tile_rows=1024):
    """x: (B, 1) float32.  Returns (B, 1) float32 = output.Linear(relu(hidden.Linear(x)))."""
    B = x.shape[0]

    # Lane-dense reshape: batch -> (rows, 128), padded so the grid tiles evenly.
    rows = pl.cdiv(B, LANES)
    if rows < tile_rows:
        # Block equals the full (sub-)array dims -> always a legal block shape.
        tile_rows = rows
    rows_padded = pl.cdiv(rows, tile_rows) * tile_rows
    padded_B = rows_padded * LANES

    xf = x.reshape(-1).astype(jnp.float32)
    if padded_B != B:
        xf = jnp.pad(xf, (0, padded_B - B))
    x2d = xf.reshape(rows_padded, LANES)

    smem = pl.BlockSpec(memory_space=pltpu.MemorySpace.SMEM)
    grid = (rows_padded // tile_rows,)

    out2d = pl.pallas_call(
        mlp_kernel,
        out_shape=jax.ShapeDtypeStruct((rows_padded, LANES), jnp.float32),
        grid=grid,
        in_specs=[smem, smem, smem, smem,
                  pl.BlockSpec((tile_rows, LANES), lambda i: (i, 0))],
        out_specs=pl.BlockSpec((tile_rows, LANES), lambda i: (i, 0)),
        compiler_params=pltpu.CompilerParams(
            dimension_semantics=("parallel",)),
    )(w1.reshape(HIDDEN).astype(jnp.float32),
      b1.reshape(HIDDEN).astype(jnp.float32),
      w2.reshape(HIDDEN).astype(jnp.float32),
      b2.reshape(1).astype(jnp.float32),
      x2d)

    return out2d.reshape(-1)[:B].reshape(B, 1)


def init_params(key):
    """Deterministic parameter init matching the PyTorch module's shapes.

    PyTorch: hidden = Linear(1, 8) -> weight (8,1), bias (8,)
             output = Linear(8, 1) -> weight (1,8), bias (1,)
    Stored transposed (in, out) for the math x @ W + b.
    """
    k1, k2, k3, k4 = jax.random.split(key, 4)
    # uniform(-1/sqrt(fan_in), 1/sqrt(fan_in)) like torch's default init
    w1 = jax.random.uniform(k1, (1, HIDDEN), jnp.float32, -1.0, 1.0)       # fan_in = 1
    b1 = jax.random.uniform(k2, (1, HIDDEN), jnp.float32, -1.0, 1.0)
    bound2 = 1.0 / jnp.sqrt(float(HIDDEN))
    w2 = jax.random.uniform(k3, (HIDDEN, 1), jnp.float32, -bound2, bound2)
    b2 = jax.random.uniform(k4, (1, 1), jnp.float32, -bound2, bound2)
    return w1, b1, w2, b2


if __name__ == "__main__":
    key = jax.random.PRNGKey(0)
    kx, kp = jax.random.split(key)

    B = 300  # deliberately not a multiple of 128 to exercise the padding path
    x = jax.random.normal(kx, (B, 1), dtype=jnp.float32)
    w1, b1, w2, b2 = init_params(kp)

    out = mlp_forward(x, w1, b1, w2, b2)
    out = jax.block_until_ready(out)

    # Pure-JAX reference check of forward semantics: relu(x @ W1 + b1) @ W2 + b2.
    ref = jnp.maximum(x @ w1 + b1, 0.0) @ w2 + b2
    assert out.shape == (B, 1)
    assert jnp.allclose(out, ref, atol=1e-5, rtol=1e-5)

    print("KERNEL_OK")
</pallas_src>

<mosaic_0001>
module attributes {stable_mosaic.version = 11 : i64} {
  func.func @mlp_kernel(%arg0: i32, %arg1: memref<8xf32, #tpu.memory_space<smem>>, %arg2: memref<8xf32, #tpu.memory_space<smem>>, %arg3: memref<8xf32, #tpu.memory_space<smem>>, %arg4: memref<1xf32, #tpu.memory_space<smem>>, %arg5: memref<3x128xf32, #tpu.memory_space<vmem>>, %arg6: memref<3x128xf32, #tpu.memory_space<vmem>>) attributes {dimension_semantics = [#tpu.dimension_semantics<parallel>], iteration_bounds = array<i64: 1>, scalar_prefetch = 0 : i64, scratch_operands = 0 : i64, tpu.core_type = #tpu.core_type<tc>, window_params = [{transform_indices = @transform_0, window_bounds = array<i64: 8>}, {transform_indices = @transform_1, window_bounds = array<i64: 8>}, {transform_indices = @transform_2, window_bounds = array<i64: 8>}, {transform_indices = @transform_3, window_bounds = array<i64: 1>}, {transform_indices = @transform_4, window_bounds = array<i64: 3, 128>}, {transform_indices = @transform_5, window_bounds = array<i64: 3, 128>}]} {
    %c0 = arith.constant 0 : index
    %c0_0 = arith.constant 0 : index
    %0 = vector.load %arg5[%c0, %c0_0] : memref<3x128xf32, #tpu.memory_space<vmem>>, vector<3x128xf32>
    %c0_1 = arith.constant 0 : index
    %1 = memref.load %arg4[%c0_1] : memref<1xf32, #tpu.memory_space<smem>>
    %2 = vector.broadcast %1 : f32 to vector<3x128xf32>
    %c0_2 = arith.constant 0 : index
    %3 = memref.load %arg1[%c0_2] : memref<8xf32, #tpu.memory_space<smem>>
    %4 = vector.broadcast %3 : f32 to vector<3x128xf32>
    %5 = arith.mulf %4, %0 : vector<3x128xf32>
    %c0_3 = arith.constant 0 : index
    %6 = memref.load %arg2[%c0_3] : memref<8xf32, #tpu.memory_space<smem>>
    %7 = vector.broadcast %6 : f32 to vector<3x128xf32>
    %8 = arith.addf %5, %7 : vector<3x128xf32>
    %cst = arith.constant 0.000000e+00 : f32
    %9 = vector.broadcast %cst : f32 to vector<3x128xf32>
    %10 = arith.maximumf %8, %9 : vector<3x128xf32>
    %c0_4 = arith.constant 0 : index
    %11 = memref.load %arg3[%c0_4] : memref<8xf32, #tpu.memory_space<smem>>
    %12 = vector.broadcast %11 : f32 to vector<3x128xf32>
    %13 = arith.mulf %12, %10 : vector<3x128xf32>
    %14 = arith.addf %2, %13 : vector<3x128xf32>
    %c1 = arith.constant 1 : index
    %15 = memref.load %arg1[%c1] : memref<8xf32, #tpu.memory_space<smem>>
    %16 = vector.broadcast %15 : f32 to vector<3x128xf32>
    %17 = arith.mulf %16, %0 : vector<3x128xf32>
    %c1_5 = arith.constant 1 : index
    %18 = memref.load %arg2[%c1_5] : memref<8xf32, #tpu.memory_space<smem>>
    %19 = vector.broadcast %18 : f32 to vector<3x128xf32>
    %20 = arith.addf %17, %19 : vector<3x128xf32>
    %cst_6 = arith.constant 0.000000e+00 : f32
    %21 = vector.broadcast %cst_6 : f32 to vector<3x128xf32>
    %22 = arith.maximumf %20, %21 : vector<3x128xf32>
    %c1_7 = arith.constant 1 : index
    %23 = memref.load %arg3[%c1_7] : memref<8xf32, #tpu.memory_space<smem>>
    %24 = vector.broadcast %23 : f32 to vector<3x128xf32>
    %25 = arith.mulf %24, %22 : vector<3x128xf32>
    %26 = arith.addf %14, %25 : vector<3x128xf32>
    %c2 = arith.constant 2 : index
    %27 = memref.load %arg1[%c2] : memref<8xf32, #tpu.memory_space<smem>>
    %28 = vector.broadcast %27 : f32 to vector<3x128xf32>
    %29 = arith.mulf %28, %0 : vector<3x128xf32>
    %c2_8 = arith.constant 2 : index
    %30 = memref.load %arg2[%c2_8] : memref<8xf32, #tpu.memory_space<smem>>
    %31 = vector.broadcast %30 : f32 to vector<3x128xf32>
    %32 = arith.addf %29, %31 : vector<3x128xf32>
    %cst_9 = arith.constant 0.000000e+00 : f32
    %33 = vector.broadcast %cst_9 : f32 to vector<3x128xf32>
    %34 = arith.maximumf %32, %33 : vector<3x128xf32>
    %c2_10 = arith.constant 2 : index
    %35 = memref.load %arg3[%c2_10] : memref<8xf32, #tpu.memory_space<smem>>
    %36 = vector.broadcast %35 : f32 to vector<3x128xf32>
    %37 = arith.mulf %36, %34 : vector<3x128xf32>
    %38 = arith.addf %26, %37 : vector<3x128xf32>
    %c3 = arith.constant 3 : index
    %39 = memref.load %arg1[%c3] : memref<8xf32, #tpu.memory_space<smem>>
    %40 = vector.broadcast %39 : f32 to vector<3x128xf32>
    %41 = arith.mulf %40, %0 : vector<3x128xf32>
    %c3_11 = arith.constant 3 : index
    %42 = memref.load %arg2[%c3_11] : memref<8xf32, #tpu.memory_space<smem>>
    %43 = vector.broadcast %42 : f32 to vector<3x128xf32>
    %44 = arith.addf %41, %43 : vector<3x128xf32>
    %cst_12 = arith.constant 0.000000e+00 : f32
    %45 = vector.broadcast %cst_12 : f32 to vector<3x128xf32>
    %46 = arith.maximumf %44, %45 : vector<3x128xf32>
    %c3_13 = arith.constant 3 : index
    %47 = memref.load %arg3[%c3_13] : memref<8xf32, #tpu.memory_space<smem>>
    %48 = vector.broadcast %47 : f32 to vector<3x128xf32>
    %49 = arith.mulf %48, %46 : vector<3x128xf32>
    %50 = arith.addf %38, %49 : vector<3x128xf32>
    %c4 = arith.constant 4 : index
    %51 = memref.load %arg1[%c4] : memref<8xf32, #tpu.memory_space<smem>>
    %52 = vector.broadcast %51 : f32 to vector<3x128xf32>
    %53 = arith.mulf %52, %0 : vector<3x128xf32>
    %c4_14 = arith.constant 4 : index
    %54 = memref.load %arg2[%c4_14] : memref<8xf32, #tpu.memory_space<smem>>
    %55 = vector.broadcast %54 : f32 to vector<3x128xf32>
    %56 = arith.addf %53, %55 : vector<3x128xf32>
    %cst_15 = arith.constant 0.000000e+00 : f32
    %57 = vector.broadcast %cst_15 : f32 to vector<3x128xf32>
    %58 = arith.maximumf %56, %57 : vector<3x128xf32>
    %c4_16 = arith.constant 4 : index
    %59 = memref.load %arg3[%c4_16] : memref<8xf32, #tpu.memory_space<smem>>
    %60 = vector.broadcast %59 : f32 to vector<3x128xf32>
    %61 = arith.mulf %60, %58 : vector<3x128xf32>
    %62 = arith.addf %50, %61 : vector<3x128xf32>
    %c5 = arith.constant 5 : index
    %63 = memref.load %arg1[%c5] : memref<8xf32, #tpu.memory_space<smem>>
    %64 = vector.broadcast %63 : f32 to vector<3x128xf32>
    %65 = arith.mulf %64, %0 : vector<3x128xf32>
    %c5_17 = arith.constant 5 : index
    %66 = memref.load %arg2[%c5_17] : memref<8xf32, #tpu.memory_space<smem>>
    %67 = vector.broadcast %66 : f32 to vector<3x128xf32>
    %68 = arith.addf %65, %67 : vector<3x128xf32>
    %cst_18 = arith.constant 0.000000e+00 : f32
    %69 = vector.broadcast %cst_18 : f32 to vector<3x128xf32>
    %70 = arith.maximumf %68, %69 : vector<3x128xf32>
    %c5_19 = arith.constant 5 : index
    %71 = memref.load %arg3[%c5_19] : memref<8xf32, #tpu.memory_space<smem>>
    %72 = vector.broadcast %71 : f32 to vector<3x128xf32>
    %73 = arith.mulf %72, %70 : vector<3x128xf32>
    %74 = arith.addf %62, %73 : vector<3x128xf32>
    %c6 = arith.constant 6 : index
    %75 = memref.load %arg1[%c6] : memref<8xf32, #tpu.memory_space<smem>>
    %76 = vector.broadcast %75 : f32 to vector<3x128xf32>
    %77 = arith.mulf %76, %0 : vector<3x128xf32>
    %c6_20 = arith.constant 6 : index
    %78 = memref.load %arg2[%c6_20] : memref<8xf32, #tpu.memory_space<smem>>
    %79 = vector.broadcast %78 : f32 to vector<3x128xf32>
    %80 = arith.addf %77, %79 : vector<3x128xf32>
    %cst_21 = arith.constant 0.000000e+00 : f32
    %81 = vector.broadcast %cst_21 : f32 to vector<3x128xf32>
    %82 = arith.maximumf %80, %81 : vector<3x128xf32>
    %c6_22 = arith.constant 6 : index
    %83 = memref.load %arg3[%c6_22] : memref<8xf32, #tpu.memory_space<smem>>
    %84 = vector.broadcast %83 : f32 to vector<3x128xf32>
    %85 = arith.mulf %84, %82 : vector<3x128xf32>
    %86 = arith.addf %74, %85 : vector<3x128xf32>
    %c7 = arith.constant 7 : index
    %87 = memref.load %arg1[%c7] : memref<8xf32, #tpu.memory_space<smem>>
    %88 = vector.broadcast %87 : f32 to vector<3x128xf32>
    %89 = arith.mulf %88, %0 : vector<3x128xf32>
    %c7_23 = arith.constant 7 : index
    %90 = memref.load %arg2[%c7_23] : memref<8xf32, #tpu.memory_space<smem>>
    %91 = vector.broadcast %90 : f32 to vector<3x128xf32>
    %92 = arith.addf %89, %91 : vector<3x128xf32>
    %cst_24 = arith.constant 0.000000e+00 : f32
    %93 = vector.broadcast %cst_24 : f32 to vector<3x128xf32>
    %94 = arith.maximumf %92, %93 : vector<3x128xf32>
    %c7_25 = arith.constant 7 : index
    %95 = memref.load %arg3[%c7_25] : memref<8xf32, #tpu.memory_space<smem>>
    %96 = vector.broadcast %95 : f32 to vector<3x128xf32>
    %97 = arith.mulf %96, %94 : vector<3x128xf32>
    %98 = arith.addf %86, %97 : vector<3x128xf32>
    %c0_26 = arith.constant 0 : index
    %c0_27 = arith.constant 0 : index
    %99 = vector.load %arg6[%c0_26, %c0_27] : memref<3x128xf32, #tpu.memory_space<vmem>>, vector<3x128xf32>
    tpu.vector_store %arg6[%c0_26, %c0_27], %98 {strides = array<i32>} : memref<3x128xf32, #tpu.memory_space<vmem>>, vector<3x128xf32>,
    return
  }
  func.func @transform_0(%arg0: i32) -> i32 {
    %c0_i32 = arith.constant 0 : i32
    %c0_i32_0 = arith.constant 0 : i32
    return %c0_i32 : i32
  }
  func.func @transform_1(%arg0: i32) -> i32 {
    %c0_i32 = arith.constant 0 : i32
    %c0_i32_0 = arith.constant 0 : i32
    return %c0_i32 : i32
  }
  func.func @transform_2(%arg0: i32) -> i32 {
    %c0_i32 = arith.constant 0 : i32
    %c0_i32_0 = arith.constant 0 : i32
    return %c0_i32 : i32
  }
  func.func @transform_3(%arg0: i32) -> i32 {
    %c0_i32 = arith.constant 0 : i32
    %c0_i32_0 = arith.constant 0 : i32
    return %c0_i32 : i32
  }
  func.func @transform_4(%arg0: i32) -> (i32, i32) {
    %c0_i32 = arith.constant 0 : i32
    %c0_i32_0 = arith.constant 0 : i32
    return %arg0, %c0_i32 : i32, i32
  }
  func.func @transform_5(%arg0: i32) -> (i32, i32) {
    %c0_i32 = arith.constant 0 : i32
    %c0_i32_0 = arith.constant 0 : i32
    return %arg0, %c0_i32 : i32, i32
  }
}

</mosaic_0001>

<llo_original>
// kernel: tpu_custom_call.1
$region0: #{tpu_custom_call.1}
  #allocation0 [shape = 'u32[]', space=smem, size = 0x4, offset = 0x4, fixed_abs, tag = 'smem constant byte address 0x4 - core index']
  #allocation1 [shape = 'u32[144,128]{1,0:T(1,128)}', space=vmem, size = 0x12000, scoped, tag = 'internal scratch']
  #allocation2 [shape = 'f32[1]{0:T(128)S(6)}', space=smem, size = 0x200, scoped, tag = 'scoped memory for tpu_custom_call.1']
  %s0 = inlined_call_operand.vmem [shape: f32[8], index: 0, kind: input, shape index: {}]
  %s1 = inlined_call_operand.vmem [shape: f32[8], index: 1, kind: input, shape index: {}]
  %s2 = inlined_call_operand.vmem [shape: f32[8], index: 2, kind: input, shape index: {}]
  %s3 = inlined_call_operand.<no memory space> [shape: f32[1], index: 3, kind: input, shape index: {}]
  %s4 = inlined_call_operand.vmem [shape: f32[3,128], index: 4, kind: input, shape index: {}]
  %s5 = inlined_call_operand.hbm [shape: f32[3,128], index: 5, kind: output, shape index: {}]
  %s6 = sld [smem:[#allocation0]]
  $region42: #{tpu_custom_call.1} parent=0
    _
  %s8 = ssub.s32 1, %s6
  %s9 = scalar_select 0, %s8, %s6
  %10 = sst [smem:[#allocation2]] %s3
  $region1: #{tpu_custom_call.1} parent=0
    #allocation3 [shape = 'u8[512]{0}', space=smem, size = 0x200, scoped, tag = 'input window, operand 0, single buffered']
    #allocation4 [shape = 's32[1]{0}', space=sflag, size = 0x4, scoped, tag = 'scoped memory for tpu_custom_call.1']
    #allocation5 [shape = 's32[1]{0}', space=sflag, size = 0x4, scoped, tag = 'scoped memory for tpu_custom_call.1']
    #allocation6 [shape = 'u8[512]{0}', space=smem, size = 0x200, scoped, tag = 'input window, operand 1, single buffered']
    #allocation7 [shape = 's32[1]{0}', space=sflag, size = 0x4, scoped, tag = 'scoped memory for tpu_custom_call.1']
    #allocation8 [shape = 'u8[512]{0}', space=smem, size = 0x200, scoped, tag = 'input window, operand 2, single buffered']
    #allocation9 [shape = 'u8[2048]{0}', space=vmem, size = 0x800, scoped, tag = 'output window, operand 0, single buffered']
    %11 = vsyncpa [#allocation5], 0
    %12 = vsyncpa [#allocation7], 0
    %13 = vsyncpa [#allocation4], 0
    // Predicated region
    $region2: #{tpu_custom_call.1} parent=1 // pred_check
      _
    $region3: #{tpu_custom_call.1} parent=1 // pred_check_branch
      %15 = sbr.rel (0) target = $region5
    $region4: #{tpu_custom_call.1} parent=1 // pred_region
      %s17 = ssub.s32 16, 16
      %18 = vsyncadd [#allocation5], %s17
      %s20 = sshll.u32 %s0, 4
      %s21 = int_to_ptr.vmem [resolvable:$true] %s20
      %23 = dma.vmem_to_smem %s21, 16, [#allocation3], [#allocation5]
    $region5: #{tpu_custom_call.1} parent=1 // pred_fallthru
      _
    // Predicated region
    $region6: #{tpu_custom_call.1} parent=1 // pred_check
      _
    $region7: #{tpu_custom_call.1} parent=1 // pred_check_branch
      %25 = sbr.rel (0) target = $region9
    $region8: #{tpu_custom_call.1} parent=1 // pred_region
      %s27 = ssub.s32 16, 16
      %28 = vsyncadd [#allocation7], %s27
      %s30 = sshll.u32 %s1, 4
      %s31 = int_to_ptr.vmem [resolvable:$true] %s30
      %33 = dma.vmem_to_smem %s31, 16, [#allocation6], [#allocation7]
    $region9: #{tpu_custom_call.1} parent=1 // pred_fallthru
      _
    // Predicated region
    $region10: #{tpu_custom_call.1} parent=1 // pred_check
      _
    $region11: #{tpu_custom_call.1} parent=1 // pred_check_branch
      %35 = sbr.rel (0) target = $region13
    $region12: #{tpu_custom_call.1} parent=1 // pred_region
      %s37 = ssub.s32 16, 16
      %38 = vsyncadd [#allocation7], %s37
      %s40 = sshll.u32 %s2, 4
      %s41 = int_to_ptr.vmem [resolvable:$true] %s40
      %43 = dma.vmem_to_smem %s41, 16, [#allocation8], [#allocation7]
    $region13: #{tpu_custom_call.1} parent=1 // pred_fallthru
      _
    // Predicated region
    $region14: #{tpu_custom_call.1} parent=1 // pred_check
      _
    $region15: #{tpu_custom_call.1} parent=1 // pred_check_branch
      %45 = sbr.rel (0) target = $region17
    $region16: #{tpu_custom_call.1} parent=1 // pred_region
      _
    $region17: #{tpu_custom_call.1} parent=1 // pred_fallthru
      _
    // Predicated region
    $region18: #{tpu_custom_call.1} parent=1 // pred_check
      _
    $region19: #{tpu_custom_call.1} parent=1 // pred_check_branch
      %47 = sbr.rel (0) target = $region21
    $region20: #{tpu_custom_call.1} parent=1 // pred_region
      _
    $region21: #{tpu_custom_call.1} parent=1 // pred_fallthru
      _
    // Predicated region
    $region22: #{tpu_custom_call.1} parent=1 // pred_check
      _
    $region23: #{tpu_custom_call.1} parent=1 // pred_check_branch
      %49 = sbr.rel (0) target = $region25
    $region24: #{tpu_custom_call.1} parent=1 // pred_region
      %50 = dma.done [#allocation5], 16
    $region25: #{tpu_custom_call.1} parent=1 // pred_fallthru
      _
    // Predicated region
    $region26: #{tpu_custom_call.1} parent=1 // pred_check
      _
    $region27: #{tpu_custom_call.1} parent=1 // pred_check_branch
      %52 = sbr.rel (0) target = $region29
    $region28: #{tpu_custom_call.1} parent=1 // pred_region
      %53 = dma.done [#allocation7], 16
    $region29: #{tpu_custom_call.1} parent=1 // pred_fallthru
      _
    // Predicated region
    $region30: #{tpu_custom_call.1} parent=1 // pred_check
      _
    $region31: #{tpu_custom_call.1} parent=1 // pred_check_branch
      %55 = sbr.rel (0) target = $region33
    $region32: #{tpu_custom_call.1} parent=1 // pred_region
      %56 = dma.done [#allocation7], 16
    $region33: #{tpu_custom_call.1} parent=1 // pred_fallthru
      _
    %57 = sfence
    %v58 = vld [vmem:[%s4] sm:$0x7]
    %s59 = sld [smem:[#allocation2]]
    %v60 = vstv %s59
    %s61 = sld [smem:[#allocation3]]
    %v62 = vstv %s61
    %v63 = vmul.f32 %v62, %v58
    %s64 = sld [smem:[#allocation6]]
    %v65 = vstv %s64
    %v66 = vadd.f32 %v63, %v65
    %v67 = vmax.f32 %v66, 0.0
    %s68 = sld [smem:[#allocation8]]
    %v69 = vstv %s68
    %v70 = vmul.f32 %v69, %v67
    %v71 = vadd.f32 %v60, %v70
    %s72 = sld [smem:[#allocation3 + $0x1]]
    %v73 = vstv %s72
    %v74 = vmul.f32 %v73, %v58
    %s75 = sld [smem:[#allocation6 + $0x1]]
    %v76 = vstv %s75
    %v77 = vadd.f32 %v74, %v76
    %v78 = vmax.f32 %v77, 0.0
    %s79 = sld [smem:[#allocation8 + $0x1]]
    %v80 = vstv %s79
    %v81 = vmul.f32 %v80, %v78
    %v82 = vadd.f32 %v71, %v81
    %s83 = sld [smem:[#allocation3 + $0x2]]
    %v84 = vstv %s83
    %v85 = vmul.f32 %v84, %v58
    %s86 = sld [smem:[#allocation6 + $0x2]]
    %v87 = vstv %s86
    %v88 = vadd.f32 %v85, %v87
    %v89 = vmax.f32 %v88, 0.0
    %s90 = sld [smem:[#allocation8 + $0x2]]
    %v91 = vstv %s90
    %v92 = vmul.f32 %v91, %v89
    %v93 = vadd.f32 %v82, %v92
    %s94 = sld [smem:[#allocation3 + $0x3]]
    %v95 = vstv %s94
    %v96 = vmul.f32 %v95, %v58
    %s97 = sld [smem:[#allocation6 + $0x3]]
    %v98 = vstv %s97
    %v99 = vadd.f32 %v96, %v98
    %v100 = vmax.f32 %v99, 0.0
    %s101 = sld [smem:[#allocation8 + $0x3]]
    %v102 = vstv %s101
    %v103 = vmul.f32 %v102, %v100
    %v104 = vadd.f32 %v93, %v103
    %s105 = sld [smem:[#allocation3 + $0x4]]
    %v106 = vstv %s105
    %v107 = vmul.f32 %v106, %v58
    %s108 = sld [smem:[#allocation6 + $0x4]]
    %v109 = vstv %s108
    %v110 = vadd.f32 %v107, %v109
    %v111 = vmax.f32 %v110, 0.0
    %s112 = sld [smem:[#allocation8 + $0x4]]
    %v113 = vstv %s112
    %v114 = vmul.f32 %v113, %v111
    %v115 = vadd.f32 %v104, %v114
    %s116 = sld [smem:[#allocation3 + $0x5]]
    %v117 = vstv %s116
    %v118 = vmul.f32 %v117, %v58
    %s119 = sld [smem:[#allocation6 + $0x5]]
    %v120 = vstv %s119
    %v121 = vadd.f32 %v118, %v120
    %v122 = vmax.f32 %v121, 0.0
    %s123 = sld [smem:[#allocation8 + $0x5]]
    %v124 = vstv %s123
    %v125 = vmul.f32 %v124, %v122
    %v126 = vadd.f32 %v115, %v125
    %s127 = sld [smem:[#allocation3 + $0x6]]
    %v128 = vstv %s127
    %v129 = vmul.f32 %v128, %v58
    %s130 = sld [smem:[#allocation6 + $0x6]]
    %v131 = vstv %s130
    %v132 = vadd.f32 %v129, %v131
    %v133 = vmax.f32 %v132, 0.0
    %s134 = sld [smem:[#allocation8 + $0x6]]
    %v135 = vstv %s134
    %v136 = vmul.f32 %v135, %v133
    %v137 = vadd.f32 %v126, %v136
    %s138 = sld [smem:[#allocation3 + $0x7]]
    %v139 = vstv %s138
    %v140 = vmul.f32 %v139, %v58
    %s141 = sld [smem:[#allocation6 + $0x7]]
    %v142 = vstv %s141
    %v143 = vadd.f32 %v140, %v142
    %v144 = vmax.f32 %v143, 0.0
    %s145 = sld [smem:[#allocation8 + $0x7]]
    %v146 = vstv %s145
    %v147 = vmul.f32 %v146, %v144
    %v148 = vadd.f32 %v137, %v147
    %149 = vst [vmem:[#allocation9] sm:$0x7] %v148
    // Predicated region
    $region34: #{tpu_custom_call.1} parent=1 // pred_check
      _
    $region35: #{tpu_custom_call.1} parent=1 // pred_check_branch
      %151 = sbr.rel (0) target = $region37
    $region36: #{tpu_custom_call.1} parent=1 // pred_region
      %s153 = ssub.s32 64, 64
      %154 = vsyncadd [#allocation4], %s153
      %s156 = sshll.u32 [#allocation9], 4
      %s157 = int_to_ptr.vmem [resolvable:$true] %s156
      %159 = dma.vmem_to_hbm [thread:$0]  %s157, 64, %s5, [#allocation4]
    $region37: #{tpu_custom_call.1} parent=1 // pred_fallthru
      _
    // Predicated region
    $region38: #{tpu_custom_call.1} parent=1 // pred_check
      _
    $region39: #{tpu_custom_call.1} parent=1 // pred_check_branch
      %161 = sbr.rel (0) target = $region41
    $region40: #{tpu_custom_call.1} parent=1 // pred_region
      %162 = dma.done [#allocation4], 64
    $region41: #{tpu_custom_call.1} parent=1 // pred_fallthru
      _
    %163 = vsyncpa [#allocation4], 1
    %164 = vsyncpa [#allocation5], 1
    %165 = vsyncpa [#allocation7], 1

</llo_original>
